<compile_context>
chip_gen: v6e
topology: v6e:2x2x1
jax: 0.10.0
libtpu: 0.0.40
codegen_flags: <defaults>
</compile_context>

<pallas_src>
import functools

import jax
import jax.numpy as jnp
from jax.experimental import pallas as pl
from jax.experimental.pallas import tpu as pltpu

HIDDEN = 32


def _pad8(n):
    return ((n + 7) // 8) * 8


def _critic_kernel(state_ref, action_ref, p_ref, b3_ref, o_ref, *,
                   in_dim, act_dim, hidden):
    # Static row offsets into the packed parameter buffer (see pack_critic_params).
    off_w1a = _pad8(in_dim)
    off_w2 = off_w1a + _pad8(act_dim)
    off_w3 = off_w2 + _pad8(hidden)

    state = state_ref[...]                               # [TB, in_dim]
    action = action_ref[...]                             # [TB, act_dim]

    w1_s = p_ref[0:in_dim, :]                            # [in_dim, H]
    w1_a = p_ref[off_w1a:off_w1a + act_dim, :]           # [act_dim, H]
    w2 = p_ref[off_w2:off_w2 + hidden, :]                # [H, H]
    w3_row = p_ref[off_w3:off_w3 + 1, :]                 # [1, H]  (fc3 weight as a row)
    b1 = p_ref[off_w3 + 1:off_w3 + 2, :]                 # [1, H]
    b2 = p_ref[off_w3 + 2:off_w3 + 3, :]                 # [1, H]

    # fc1 on the fused (state | action) input; the concat is implicit:
    #   cat([s, a]) @ W1 == s @ W1[:in_dim] + a @ W1[in_dim:]
    h1 = (jnp.dot(state, w1_s, preferred_element_type=jnp.float32)
          + jnp.dot(action, w1_a, preferred_element_type=jnp.float32)
          + b1)
    h1 = jnp.maximum(h1, 0.0)

    h2 = jnp.dot(h1, w2, preferred_element_type=jnp.float32) + b2
    h2 = jnp.maximum(h2, 0.0)

    # fc3: single output feature -> VPU multiply + lane reduce, no MXU pass.
    q = jnp.sum(h2 * w3_row, axis=-1, keepdims=True) + b3_ref[0, 0]
    o_ref[...] = q.astype(o_ref.dtype)


def pack_critic_params(params, *, input_dim, action_dim, hidden=HIDDEN):
    """Pack W1/W2/W3/b1/b2 into one f32 matrix (+ scalar b3 separately).

    Row layout (each weight block starts on an 8-row sublane boundary so the
    in-kernel slices never straddle a sublane tile):
      [0, in_dim)                     : W1 rows multiplying `state`
      [pad8(in_dim), +act_dim)        : W1 rows multiplying `action`
      [off_w2, +hidden)               : W2
      off_w3 / off_w3+1 / off_w3+2    : W3 row / b1 / b2
    Call ONCE at setup time (plain XLA, not per-forward work).
    """
    (w1, b1), (w2, b2), (w3, b3) = params
    off_w1a = _pad8(input_dim)
    off_w2 = off_w1a + _pad8(action_dim)
    off_w3 = off_w2 + _pad8(hidden)
    rows = _pad8(off_w3 + 3)

    packed = jnp.zeros((rows, hidden), jnp.float32)
    packed = packed.at[0:input_dim, :].set(w1[:input_dim, :])
    packed = packed.at[off_w1a:off_w1a + action_dim, :].set(w1[input_dim:, :])
    packed = packed.at[off_w2:off_w2 + hidden, :].set(w2)
    packed = packed.at[off_w3, :].set(w3.reshape(hidden))
    packed = packed.at[off_w3 + 1, :].set(b1.reshape(hidden))
    packed = packed.at[off_w3 + 2, :].set(b2.reshape(hidden))
    b3_scalar = jnp.asarray(b3, jnp.float32).reshape(1, 1)
    return packed, b3_scalar


def critic_forward(state, action, packed, b3, *, block_b=512):
    """Q(state, action) -> [B, 1]; whole 3-layer MLP in one pallas_call."""
    B, in_dim = state.shape
    act_dim = action.shape[1]
    hidden = packed.shape[1]
    state = state.astype(jnp.float32)
    action = action.astype(jnp.float32)

    # Small batches: one full block (grid=(1,), block == full array -> layout
    # constraint satisfied).  Large batches: TB-row tiles (TB % 8 == 0),
    # weights stay VMEM-resident across the grid.
    if B <= block_b:
        tb = B
        b_pad = B
    else:
        tb = block_b
        b_pad = pl.cdiv(B, tb) * tb
        if b_pad != B:
            state = jnp.pad(state, ((0, b_pad - B), (0, 0)))
            action = jnp.pad(action, ((0, b_pad - B), (0, 0)))
    grid = (b_pad // tb,)

    kernel = functools.partial(
        _critic_kernel, in_dim=in_dim, act_dim=act_dim, hidden=hidden)

    out = pl.pallas_call(
        kernel,
        out_shape=jax.ShapeDtypeStruct((b_pad, 1), jnp.float32),
        grid=grid,
        in_specs=[
            pl.BlockSpec((tb, in_dim), lambda i: (i, 0)),
            pl.BlockSpec((tb, act_dim), lambda i: (i, 0)),
            # Whole packed-parameter matrix; same block every grid step ->
            # DMA'd once, VMEM-resident across the batch grid.
            pl.BlockSpec(packed.shape, lambda i: (0, 0)),
            # Scalar fc3 bias on the scalar path (no vector DMA / vreg load).
            pl.BlockSpec(memory_space=pltpu.MemorySpace.SMEM),
        ],
        out_specs=pl.BlockSpec((tb, 1), lambda i: (i, 0)),
        compiler_params=pltpu.CompilerParams(
            dimension_semantics=("parallel",)),
    )(state, action, packed, b3)
    return out[:B] if b_pad != B else out


def init_critic_params(key, input_dim, action_dim, hidden=HIDDEN):
    """Deterministic init mimicking PyTorch Linear default (U[-1/sqrt(fan_in), +])."""
    dims = [(input_dim + action_dim, hidden), (hidden, hidden), (hidden, 1)]
    params = []
    for fan_in, fan_out in dims:
        key, kw, kb = jax.random.split(key, 3)
        bound = 1.0 / jnp.sqrt(jnp.float32(fan_in))
        # Stored already transposed: [in_features, out_features]
        w = jax.random.uniform(kw, (fan_in, fan_out), jnp.float32, -bound, bound)
        b = jax.random.uniform(kb, (1, fan_out), jnp.float32, -bound, bound)
        params.append((w, b))
    return params


def _reference_forward(state, action, params):
    (w1, b1), (w2, b2), (w3, b3) = params
    x = jnp.concatenate([state, action], axis=1)
    h1 = jnp.maximum(x @ w1 + b1, 0.0)
    h2 = jnp.maximum(h1 @ w2 + b2, 0.0)
    return h2 @ w3 + b3


if __name__ == "__main__":
    key = jax.random.PRNGKey(0)
    k_state, k_action, k_params = jax.random.split(key, 3)

    batch = 8
    input_dim = 8
    action_dim = 4

    state = jax.random.normal(k_state, (batch, input_dim), jnp.float32)
    action = jax.random.normal(k_action, (batch, action_dim), jnp.float32)
    params = init_critic_params(k_params, input_dim, action_dim)

    # Pack once (setup-time), reuse across every forward call.
    packed, b3 = pack_critic_params(
        params, input_dim=input_dim, action_dim=action_dim)

    # Small-batch path (single block).
    q = jax.block_until_ready(critic_forward(state, action, packed, b3))
    q_ref = _reference_forward(state, action, params)
    assert q.shape == (batch, 1)
    assert jnp.allclose(q, q_ref, atol=1e-5, rtol=1e-5)

    # Large ragged batch exercises the tiled/padded grid path.
    big = 600
    k_s2, k_a2 = jax.random.split(k_state)
    state2 = jax.random.normal(k_s2, (big, input_dim), jnp.float32)
    action2 = jax.random.normal(k_a2, (big, action_dim), jnp.float32)
    q2 = jax.block_until_ready(critic_forward(state2, action2, packed, b3))
    q2_ref = _reference_forward(state2, action2, params)
    assert q2.shape == (big, 1)
    assert jnp.allclose(q2, q2_ref, atol=1e-5, rtol=1e-5)

    print("KERNEL_OK")
</pallas_src>

<mosaic_0001>
module attributes {stable_mosaic.version = 11 : i64} {
  func.func @_critic_kernel(%arg0: i32, %arg1: memref<8x8xf32, #tpu.memory_space<vmem>>, %arg2: memref<8x4xf32, #tpu.memory_space<vmem>>, %arg3: memref<56x32xf32, #tpu.memory_space<vmem>>, %arg4: memref<1x1xf32, #tpu.memory_space<smem>>, %arg5: memref<8x1xf32, #tpu.memory_space<vmem>>) attributes {dimension_semantics = [#tpu.dimension_semantics<parallel>], iteration_bounds = array<i64: 1>, scalar_prefetch = 0 : i64, scratch_operands = 0 : i64, tpu.core_type = #tpu.core_type<tc>, window_params = [{transform_indices = @transform_0, window_bounds = array<i64: 8, 8>}, {transform_indices = @transform_1, window_bounds = array<i64: 8, 4>}, {pipeline_mode = #tpu.pipeline_mode<synchronous>, transform_indices = @transform_2, window_bounds = array<i64: 56, 32>}, {transform_indices = @transform_3, window_bounds = array<i64: 1, 1>}, {transform_indices = @transform_4, window_bounds = array<i64: 8, 1>}]} {
    %c0 = arith.constant 0 : index
    %c0_0 = arith.constant 0 : index
    %0 = vector.load %arg1[%c0, %c0_0] : memref<8x8xf32, #tpu.memory_space<vmem>>, vector<8x8xf32>
    %c0_1 = arith.constant 0 : index
    %c0_2 = arith.constant 0 : index
    %1 = vector.load %arg2[%c0_1, %c0_2] : memref<8x4xf32, #tpu.memory_space<vmem>>, vector<8x4xf32>
    %c0_3 = arith.constant 0 : index
    %c0_4 = arith.constant 0 : index
    %2 = vector.load %arg3[%c0_3, %c0_4] : memref<56x32xf32, #tpu.memory_space<vmem>>, vector<8x32xf32>
    %c8 = arith.constant 8 : index
    %c0_5 = arith.constant 0 : index
    %3 = vector.load %arg3[%c8, %c0_5] : memref<56x32xf32, #tpu.memory_space<vmem>>, vector<4x32xf32>
    %c16 = arith.constant 16 : index
    %c0_6 = arith.constant 0 : index
    %4 = vector.load %arg3[%c16, %c0_6] : memref<56x32xf32, #tpu.memory_space<vmem>>, vector<32x32xf32>
    %c48 = arith.constant 48 : index
    %c0_7 = arith.constant 0 : index
    %5 = vector.load %arg3[%c48, %c0_7] : memref<56x32xf32, #tpu.memory_space<vmem>>, vector<1x32xf32>
    %c49 = arith.constant 49 : index
    %c0_8 = arith.constant 0 : index
    %6 = vector.load %arg3[%c49, %c0_8] : memref<56x32xf32, #tpu.memory_space<vmem>>, vector<1x32xf32>
    %c50 = arith.constant 50 : index
    %c0_9 = arith.constant 0 : index
    %7 = vector.load %arg3[%c50, %c0_9] : memref<56x32xf32, #tpu.memory_space<vmem>>, vector<1x32xf32>
    %cst = arith.constant dense<0.000000e+00> : vector<8x32xf32>
    %8 = tpu.matmul %0, %2, %cst {dimension_numbers = #tpu.dot_dimension_numbers<[1], [0], [0], [1], [0, 0, 1, 1], [], []>} : vector<8x8xf32>, vector<8x32xf32>, vector<8x32xf32> -> vector<8x32xf32>
    %cst_10 = arith.constant dense<0.000000e+00> : vector<8x32xf32>
    %9 = tpu.matmul %1, %3, %cst_10 {dimension_numbers = #tpu.dot_dimension_numbers<[1], [0], [0], [1], [0, 0, 1, 1], [], []>} : vector<8x4xf32>, vector<4x32xf32>, vector<8x32xf32> -> vector<8x32xf32>
    %10 = arith.addf %8, %9 : vector<8x32xf32>
    %11 = vector.broadcast %6 : vector<1x32xf32> to vector<8x32xf32>
    %12 = arith.addf %10, %11 : vector<8x32xf32>
    %cst_11 = arith.constant 0.000000e+00 : f32
    %13 = vector.broadcast %cst_11 : f32 to vector<8x32xf32>
    %14 = arith.maximumf %12, %13 : vector<8x32xf32>
    %cst_12 = arith.constant dense<0.000000e+00> : vector<8x32xf32>
    %15 = tpu.matmul %14, %4, %cst_12 {dimension_numbers = #tpu.dot_dimension_numbers<[1], [0], [0], [1], [0, 0, 1, 1], [], []>} : vector<8x32xf32>, vector<32x32xf32>, vector<8x32xf32> -> vector<8x32xf32>
    %16 = vector.broadcast %7 : vector<1x32xf32> to vector<8x32xf32>
    %17 = arith.addf %15, %16 : vector<8x32xf32>
    %cst_13 = arith.constant 0.000000e+00 : f32
    %18 = vector.broadcast %cst_13 : f32 to vector<8x32xf32>
    %19 = arith.maximumf %17, %18 : vector<8x32xf32>
    %20 = vector.broadcast %5 : vector<1x32xf32> to vector<8x32xf32>
    %21 = arith.mulf %19, %20 : vector<8x32xf32>
    %cst_14 = arith.constant dense<0.000000e+00> : vector<8xf32>
    %22 = vector.multi_reduction <add>, %21, %cst_14 [1] : vector<8x32xf32> to vector<8xf32>
    %23 = vector.shape_cast %22 : vector<8xf32> to vector<8x1xf32>
    %c0_15 = arith.constant 0 : index
    %c0_16 = arith.constant 0 : index
    %24 = memref.load %arg4[%c0_15, %c0_16] : memref<1x1xf32, #tpu.memory_space<smem>>
    %25 = vector.broadcast %24 : f32 to vector<8x1xf32>
    %26 = arith.addf %23, %25 : vector<8x1xf32>
    %c0_17 = arith.constant 0 : index
    %c0_18 = arith.constant 0 : index
    %27 = vector.load %arg5[%c0_17, %c0_18] : memref<8x1xf32, #tpu.memory_space<vmem>>, vector<8x1xf32>
    tpu.vector_store %arg5[%c0_17, %c0_18], %26 {strides = array<i32>} : memref<8x1xf32, #tpu.memory_space<vmem>>, vector<8x1xf32>,
    return
  }
  func.func @transform_0(%arg0: i32) -> (i32, i32) {
    %c0_i32 = arith.constant 0 : i32
    %c0_i32_0 = arith.constant 0 : i32
    return %arg0, %c0_i32 : i32, i32
  }
  func.func @transform_1(%arg0: i32) -> (i32, i32) {
    %c0_i32 = arith.constant 0 : i32
    %c0_i32_0 = arith.constant 0 : i32
    return %arg0, %c0_i32 : i32, i32
  }
  func.func @transform_2(%arg0: i32) -> (i32, i32) {
    %c0_i32 = arith.constant 0 : i32
    %c0_i32_0 = arith.constant 0 : i32
    %c0_i32_1 = arith.constant 0 : i32
    return %c0_i32, %c0_i32_0 : i32, i32
  }
  func.func @transform_3(%arg0: i32) -> (i32, i32) {
    %c0_i32 = arith.constant 0 : i32
    %c0_i32_0 = arith.constant 0 : i32
    %c0_i32_1 = arith.constant 0 : i32
    return %c0_i32, %c0_i32_0 : i32, i32
  }
  func.func @transform_4(%arg0: i32) -> (i32, i32) {
    %c0_i32 = arith.constant 0 : i32
    %c0_i32_0 = arith.constant 0 : i32
    return %arg0, %c0_i32 : i32, i32
  }
}

</mosaic_0001>

<llo_original>
// kernel: tpu_custom_call.1
$region0: #{tpu_custom_call.1}
  #allocation0 [shape = 'u32[]', space=smem, size = 0x4, offset = 0x4, fixed_abs, tag = 'smem constant byte address 0x4 - core index']
  #allocation1 [shape = 'u32[144,128]{1,0:T(1,128)}', space=vmem, size = 0x12000, scoped, tag = 'internal scratch']
  #allocation2 [shape = 'f32[1,1]{1,0:T(1,128)S(6)}', space=smem, size = 0x200, scoped, tag = 'scoped memory for tpu_custom_call.1']
  %s0 = inlined_call_operand.vmem [shape: f32[8,8], index: 0, kind: input, shape index: {}]
  %s1 = inlined_call_operand.vmem [shape: f32[8,4], index: 1, kind: input, shape index: {}]
  %s2 = inlined_call_operand.vmem [shape: f32[56,32], index: 2, kind: input, shape index: {}]
  %s3 = inlined_call_operand.<no memory space> [shape: f32[1,1], index: 3, kind: input, shape index: {}]
  %s4 = inlined_call_operand.vmem [shape: f32[8,1], index: 4, kind: output, shape index: {}]
  %s5 = sld [smem:[#allocation0]]
  $region26: #{tpu_custom_call.1} parent=0
    _
  %s7 = ssub.s32 1, %s5
  %s8 = scalar_select 0, %s7, %s5
  %9 = sst [smem:[#allocation2]] %s3
  // Predicated region
  $region2: #{tpu_custom_call.1} parent=0 // pred_check
    _
  $region3: #{tpu_custom_call.1} parent=0 // pred_check_branch
    %11 = sbr.rel (0) target = $region5
  $region4: #{tpu_custom_call.1} parent=0 // pred_region
    _
  $region5: #{tpu_custom_call.1} parent=0 // pred_fallthru
    _
  // Predicated region
  $region6: #{tpu_custom_call.1} parent=0 // pred_check
    _
  $region7: #{tpu_custom_call.1} parent=0 // pred_check_branch
    %13 = sbr.rel (0) target = $region9
  $region8: #{tpu_custom_call.1} parent=0 // pred_region
    _
  $region9: #{tpu_custom_call.1} parent=0 // pred_fallthru
    _
  // Predicated region
  $region10: #{tpu_custom_call.1} parent=0 // pred_check
    _
  $region11: #{tpu_custom_call.1} parent=0 // pred_check_branch
    %15 = sbr.rel (0) target = $region13
  $region12: #{tpu_custom_call.1} parent=0 // pred_region
    _
  $region13: #{tpu_custom_call.1} parent=0 // pred_fallthru
    _
  // Predicated region
  $region14: #{tpu_custom_call.1} parent=0 // pred_check
    _
  $region15: #{tpu_custom_call.1} parent=0 // pred_check_branch
    %17 = sbr.rel (0) target = $region17
  $region16: #{tpu_custom_call.1} parent=0 // pred_region
    _
  $region17: #{tpu_custom_call.1} parent=0 // pred_fallthru
    _
  %v18 = vld [vmem:[%s0] sm:$0xff]
  %v19 = vld [vmem:[%s1] sm:$0xff]
  %v20 = vld [vmem:[%s2] sm:$0xff]
  %v21 = vld [vmem:[%s2 + $0x8] sm:$0xf]
  %v22 = vld [vmem:[%s2 + $0x10] sm:$0xff]
  %v23 = vld [vmem:[%s2 + $0x18] sm:$0xff]
  %v24 = vld [vmem:[%s2 + $0x20] sm:$0xff]
  %v25 = vld [vmem:[%s2 + $0x28] sm:$0xff]
  %v26 = vld [vmem:[%s2 + $0x30] sm:$0x1]
  %v27 = vld [vmem:[%s2 + $0x31] sm:$0x1]
  %v28 = vld [vmem:[%s2 + $0x32] sm:$0x1]
  %vm29 = vcmask 31744
  %v31 = vsel %vm29, %v19, 0
  %vm33 = vcmask 1043456
  %v35 = vsel %vm33, %v21, 0
  %37 = vmatprep.subr.mxu0 0.0
  %38 = vmatpush1.msra.mxu0 0.0
  %39 = vmatprep.subr.mxu0 0.0
  %40 = vmatpush1.msra.mxu0 0.0
  %41 = vmatprep.subr.mxu0 0.0
  %42 = vmatpush1.msra.mxu0 0.0
  %43 = vmatprep.subr.mxu0 0.0
  %44 = vmatpush1.msra.mxu0 0.0
  %45 = vmatprep.subr.mxu0 0.0
  %46 = vmatpush1.msra.mxu0 0.0
  %47 = vmatprep.subr.mxu0 0.0
  %48 = vmatpush1.msra.mxu0 0.0
  %49 = vmatprep.subr.mxu0 0.0
  %50 = vmatpush1.msra.mxu0 0.0
  %51 = vmatprep.subr.mxu0 0.0
  %52 = vmatpush1.msra.mxu0 0.0
  %53 = vmatprep.subr.mxu0 0.0
  %54 = vmatpush1.msra.mxu0 0.0
  %55 = vmatprep.subr.mxu0 0.0
  %56 = vmatpush1.msra.mxu0 0.0
  %57 = vmatprep.subr.mxu0 0.0
  %58 = vmatpush1.msra.mxu0 0.0
  %59 = vmatprep.subr.mxu0 0.0
  %60 = vmatpush1.msra.mxu0 0.0
  %61 = vmatprep.subr.mxu0 0.0
  %62 = vmatpush1.msra.mxu0 0.0
  %63 = vmatprep.subr.mxu0 0.0
  %64 = vmatpush1.msra.mxu0 0.0
  %65 = vmatprep.subr.mxu0 0.0
  %66 = vmatpush1.msra.mxu0 0.0
  %67 = vmatprep.subr.mxu0 0.0
  %68 = vmatpush1.msra.mxu0 %v35
  %69 = vmatprep.subr.mxu0 0.0
  %70 = vmatpush2.msra.mxu0 0.0
  %71 = vmatprep.subr.mxu0 0.0
  %72 = vmatpush2.msra.mxu0 0.0
  %73 = vmatprep.subr.mxu0 0.0
  %74 = vmatpush2.msra.mxu0 0.0
  %75 = vmatprep.subr.mxu0 0.0
  %76 = vmatpush2.msra.mxu0 0.0
  %77 = vmatprep.subr.mxu0 0.0
  %78 = vmatpush2.msra.mxu0 0.0
  %79 = vmatprep.subr.mxu0 0.0
  %80 = vmatpush2.msra.mxu0 0.0
  %81 = vmatprep.subr.mxu0 0.0
  %82 = vmatpush2.msra.mxu0 0.0
  %83 = vmatprep.subr.mxu0 0.0
  %84 = vmatpush2.msra.mxu0 0.0
  %85 = vmatprep.subr.mxu0 0.0
  %86 = vmatpush2.msra.mxu0 0.0
  %87 = vmatprep.subr.mxu0 0.0
  %88 = vmatpush2.msra.mxu0 0.0
  %89 = vmatprep.subr.mxu0 0.0
  %90 = vmatpush2.msra.mxu0 0.0
  %91 = vmatprep.subr.mxu0 0.0
  %92 = vmatpush2.msra.mxu0 0.0
  %93 = vmatprep.subr.mxu0 0.0
  %94 = vmatpush2.msra.mxu0 0.0
  %95 = vmatprep.subr.mxu0 0.0
  %96 = vmatpush2.msra.mxu0 0.0
  %97 = vmatprep.subr.mxu0 0.0
  %98 = vmatpush2.msra.mxu0 0.0
  %99 = vmatprep.subr.mxu0 0.0
  %100 = vmatpush2.msra.mxu0 0.0
  %101 = vmatprep.mubr.f32.mxu0 0.0
  %102 = vmatmul.mubr.f32.gmra.mxu0 %v31
  %v103 = vpop.f32.mrf.mxu0
  %v104 = vadd.f32 0.0, %v103
  %v105 = vpop.f32.mrf.mxu0
  %106 = vdwg.mxu0
  %vm107 = vcmask 64512
  %v109 = vsel %vm107, %v18, 0
  %111 = vmatprep.subr.mxu0 0.0
  %112 = vmatpush1.msra.mxu0 0.0
  %113 = vmatprep.subr.mxu0 0.0
  %114 = vmatpush1.msra.mxu0 0.0
  %115 = vmatprep.subr.mxu0 0.0
  %116 = vmatpush1.msra.mxu0 0.0
  %117 = vmatprep.subr.mxu0 0.0
  %118 = vmatpush1.msra.mxu0 0.0
  %119 = vmatprep.subr.mxu0 0.0
  %120 = vmatpush1.msra.mxu0 0.0
  %121 = vmatprep.subr.mxu0 0.0
  %122 = vmatpush1.msra.mxu0 0.0
  %123 = vmatprep.subr.mxu0 0.0
  %124 = vmatpush1.msra.mxu0 0.0
  %125 = vmatprep.subr.mxu0 0.0
  %126 = vmatpush1.msra.mxu0 0.0
  %127 = vmatprep.subr.mxu0 0.0
  %128 = vmatpush1.msra.mxu0 0.0
  %129 = vmatprep.subr.mxu0 0.0
  %130 = vmatpush1.msra.mxu0 0.0
  %131 = vmatprep.subr.mxu0 0.0
  %132 = vmatpush1.msra.mxu0 0.0
  %133 = vmatprep.subr.mxu0 0.0
  %134 = vmatpush1.msra.mxu0 0.0
  %135 = vmatprep.subr.mxu0 0.0
  %136 = vmatpush1.msra.mxu0 0.0
  %137 = vmatprep.subr.mxu0 0.0
  %138 = vmatpush1.msra.mxu0 0.0
  %139 = vmatprep.subr.mxu0 0.0
  %140 = vmatpush1.msra.mxu0 0.0
  %141 = vmatprep.subr.mxu0 0.0
  %142 = vmatpush1.msra.mxu0 %v20
  %143 = vmatprep.subr.mxu0 0.0
  %144 = vmatpush2.msra.mxu0 0.0
  %145 = vmatprep.subr.mxu0 0.0
  %146 = vmatpush2.msra.mxu0 0.0
  %147 = vmatprep.subr.mxu0 0.0
  %148 = vmatpush2.msra.mxu0 0.0
  %149 = vmatprep.subr.mxu0 0.0
  %150 = vmatpush2.msra.mxu0 0.0
  %151 = vmatprep.subr.mxu0 0.0
  %152 = vmatpush2.msra.mxu0 0.0
  %153 = vmatprep.subr.mxu0 0.0
  %154 = vmatpush2.msra.mxu0 0.0
  %155 = vmatprep.subr.mxu0 0.0
  %156 = vmatpush2.msra.mxu0 0.0
  %157 = vmatprep.subr.mxu0 0.0
  %158 = vmatpush2.msra.mxu0 0.0
  %159 = vmatprep.subr.mxu0 0.0
  %160 = vmatpush2.msra.mxu0 0.0
  %161 = vmatprep.subr.mxu0 0.0
  %162 = vmatpush2.msra.mxu0 0.0
  %163 = vmatprep.subr.mxu0 0.0
  %164 = vmatpush2.msra.mxu0 0.0
  %165 = vmatprep.subr.mxu0 0.0
  %166 = vmatpush2.msra.mxu0 0.0
  %167 = vmatprep.subr.mxu0 0.0
  %168 = vmatpush2.msra.mxu0 0.0
  %169 = vmatprep.subr.mxu0 0.0
  %170 = vmatpush2.msra.mxu0 0.0
  %171 = vmatprep.subr.mxu0 0.0
  %172 = vmatpush2.msra.mxu0 0.0
  %173 = vmatprep.subr.mxu0 0.0
  %174 = vmatpush2.msra.mxu0 0.0
  %175 = vmatprep.mubr.f32.mxu0 0.0
  %176 = vmatmul.mubr.f32.gmra.mxu0 %v109
  %v177 = vpop.f32.mrf.mxu0
  %v178 = vadd.f32 %v104, %v177
  %v179 = vpop.f32.mrf.mxu0
  %180 = vdwg.mxu0
  %v181 = vlaneseq
  %v182 = vshrl.u32 %v181, 7
  %v183 = vsub.s32 0, %v182
  %v184 = vrot.slane %v27, %v183
  %v185 = vadd.f32 %v178, %v184
  %v186 = vmax.f32 %v185, 0.0
  %v187 = vlaneseq
  %v188 = vshrl.u32 %v187, 7
  %v189 = vsub.s32 0, %v188
  %v190 = vrot.slane %v28, %v189
  %vm191 = vcmask 261120
  %v193 = vsel %vm191, %v186, 0
  %195 = vmatprep.subr.mxu0 0.0
  %196 = vmatpush1.msra.mxu0 0.0
  %197 = vmatprep.subr.mxu0 0.0
  %198 = vmatpush1.msra.mxu0 0.0
  %199 = vmatprep.subr.mxu0 0.0
  %200 = vmatpush1.msra.mxu0 0.0
  %201 = vmatprep.subr.mxu0 0.0
  %202 = vmatpush1.msra.mxu0 0.0
  %203 = vmatprep.subr.mxu0 0.0
  %204 = vmatpush1.msra.mxu0 0.0
  %205 = vmatprep.subr.mxu0 0.0
  %206 = vmatpush1.msra.mxu0 0.0
  %207 = vmatprep.subr.mxu0 0.0
  %208 = vmatpush1.msra.mxu0 0.0
  %209 = vmatprep.subr.mxu0 0.0
  %210 = vmatpush1.msra.mxu0 0.0
  %211 = vmatprep.subr.mxu0 0.0
  %212 = vmatpush1.msra.mxu0 0.0
  %213 = vmatprep.subr.mxu0 0.0
  %214 = vmatpush1.msra.mxu0 0.0
  %215 = vmatprep.subr.mxu0 0.0
  %216 = vmatpush1.msra.mxu0 0.0
  %217 = vmatprep.subr.mxu0 0.0
  %218 = vmatpush1.msra.mxu0 0.0
  %219 = vmatprep.subr.mxu0 0.0
  %220 = vmatpush1.msra.mxu0 %v25
  %221 = vmatprep.subr.mxu0 0.0
  %222 = vmatpush1.msra.mxu0 %v24
  %223 = vmatprep.subr.mxu0 0.0
  %224 = vmatpush1.msra.mxu0 %v23
  %225 = vmatprep.subr.mxu0 0.0
  %226 = vmatpush1.msra.mxu0 %v22
  %227 = vmatprep.subr.mxu0 0.0
  %228 = vmatpush2.msra.mxu0 0.0
  %229 = vmatprep.subr.mxu0 0.0
  %230 = vmatpush2.msra.mxu0 0.0
  %231 = vmatprep.subr.mxu0 0.0
  %232 = vmatpush2.msra.mxu0 0.0
  %233 = vmatprep.subr.mxu0 0.0
  %234 = vmatpush2.msra.mxu0 0.0
  %235 = vmatprep.subr.mxu0 0.0
  %236 = vmatpush2.msra.mxu0 0.0
  %237 = vmatprep.subr.mxu0 0.0
  %238 = vmatpush2.msra.mxu0 0.0
  %239 = vmatprep.subr.mxu0 0.0
  %240 = vmatpush2.msra.mxu0 0.0
  %241 = vmatprep.subr.mxu0 0.0
  %242 = vmatpush2.msra.mxu0 0.0
  %243 = vmatprep.subr.mxu0 0.0
  %244 = vmatpush2.msra.mxu0 0.0
  %245 = vmatprep.subr.mxu0 0.0
  %246 = vmatpush2.msra.mxu0 0.0
  %247 = vmatprep.subr.mxu0 0.0
  %248 = vmatpush2.msra.mxu0 0.0
  %249 = vmatprep.subr.mxu0 0.0
  %250 = vmatpush2.msra.mxu0 0.0
  %251 = vmatprep.subr.mxu0 0.0
  %252 = vmatpush2.msra.mxu0 0.0
  %253 = vmatprep.subr.mxu0 0.0
  %254 = vmatpush2.msra.mxu0 0.0
  %255 = vmatprep.subr.mxu0 0.0
  %256 = vmatpush2.msra.mxu0 0.0
  %257 = vmatprep.subr.mxu0 0.0
  %258 = vmatpush2.msra.mxu0 0.0
  %259 = vmatprep.mubr.f32.mxu0 0.0
  %260 = vmatmul.mubr.f32.gmra.mxu0 %v193
  %v261 = vpop.f32.mrf.mxu0
  %v262 = vadd.f32 %v190, %v261
  %v263 = vpop.f32.mrf.mxu0
  %264 = vdwg.mxu0
  %v265 = vmax.f32 %v262, 0.0
  %v266 = vlaneseq
  %v267 = vshrl.u32 %v266, 7
  %v268 = vsub.s32 0, %v267
  %v269 = vrot.slane %v26, %v268
  %v270 = vmul.f32 %v265, %v269
  %v271 = vsel %vm191, %v270, 0.0
  %272 = vadd.xlane.f32.xlu0 %v271
  %v273 = vpop.xlane.xlu0 %272
  %s274 = sld [smem:[#allocation2]]
  %v275 = vstv %s274
  %v276 = vadd.f32 %v273, %v275
  %vm277 = vcmask 7168
  %278 = vst.msk [vmem:[%s4] sm:$0xff] %vm277, %v276
  // Predicated region
  $region18: #{tpu_custom_call.1} parent=0 // pred_check
    _
  $region19: #{tpu_custom_call.1} parent=0 // pred_check_branch
    %280 = sbr.rel (0) target = $region21
  $region20: #{tpu_custom_call.1} parent=0 // pred_region
    _
  $region21: #{tpu_custom_call.1} parent=0 // pred_fallthru
    _
  // Predicated region
  $region22: #{tpu_custom_call.1} parent=0 // pred_check
    _
  $region23: #{tpu_custom_call.1} parent=0 // pred_check_branch
    %282 = sbr.rel (0) target = $region25
  $region24: #{tpu_custom_call.1} parent=0 // pred_region
    _
  $region25: #{tpu_custom_call.1} parent=0 // pred_fallthru
    _

</llo_original>
